<compile_context>
chip_gen: v6e
topology: v6e:2x2x1
jax: 0.10.0
libtpu: 0.0.40
codegen_flags: <defaults>
</compile_context>

<pallas_src>
import jax
import jax.numpy as jnp
from jax.experimental import pallas as pl
from jax.experimental.pallas import tpu as pltpu

# Problem sizes (small, consistent with the module's forward).
B, C_IN, H, W = 2, 4, 16, 16     # input (B, C, H, W), PyTorch NCHW convention
C_OUT = 8                        # encoder feature dim
HID = 32                         # projection hidden dim
PROJ = 16                        # projection output dim
K = 3                            # 3x3 conv, 'same' padding
HW = H * W                       # 256  (multiple of 128 -> lane-dense)
KKC = K * K * C_IN               # 36   (im2col contraction depth)

# Packed-parameter slab: one f32 operand.  Row offsets are all multiples of 8
# and every slice starts at column 0, so the in-kernel static slices are
# layout-trivial (no sublane/lane-offset loads).
R_WCONV = 0                      # (C_OUT, KKC)  conv weight, transposed
R_W1T   = R_WCONV + C_OUT        # (HID, C_OUT)  = W1.T
R_W2T   = R_W1T + HID            # (PROJ, HID)   = W2.T
R_BCONV = R_W2T + PROJ           # (C_OUT, 1)
R_B1    = R_BCONV + C_OUT        # (HID, 1)
R_B2    = R_B1 + HID             # (PROJ, 1)
P_ROWS  = R_B2 + PROJ            # 112
P_COLS  = KKC                    # 36


def _simclr_kernel(patches_ref, params_ref, out_ref, feat_ref):
    """Whole batch in one invocation; batch rides the lane axis.

    patches_ref: (KKC, B*HW)      f32  im2col columns, sample-major on lanes
    params_ref:  (P_ROWS, P_COLS) f32  packed weights/biases (see R_* above)
    out_ref:     (PROJ, B)        f32  projection output, batch on lanes
    feat_ref:    (C_OUT, B)       f32  VMEM scratch for pooled features
    """
    wconv = params_ref[R_WCONV:R_WCONV + C_OUT, 0:KKC]     # (C_OUT, KKC)
    w1t   = params_ref[R_W1T:R_W1T + HID, 0:C_OUT]         # (HID, C_OUT)
    w2t   = params_ref[R_W2T:R_W2T + PROJ, 0:HID]          # (PROJ, HID)
    bconv = params_ref[R_BCONV:R_BCONV + C_OUT, 0:1]       # (C_OUT, 1)
    b1    = params_ref[R_B1:R_B1 + HID, 0:1]               # (HID, 1)
    b2    = params_ref[R_B2:R_B2 + PROJ, 0:1]              # (PROJ, 1)

    # --- encoder: ONE im2col matmul over the whole batch + bias + ReLU -----
    y = jnp.dot(wconv, patches_ref[...],
                preferred_element_type=jnp.float32)         # (C_OUT, B*HW)
    y = jnp.maximum(y + bconv, 0.0)

    # --- global average pool: XLU lane reduction per sample (no matmul, ----
    # --- no lane-padded pooling constant).  B is tiny and static.       ----
    for b in range(B):
        feat_ref[:, b:b + 1] = jnp.sum(
            y[:, b * HW:(b + 1) * HW], axis=-1, keepdims=True) * (1.0 / HW)

    # --- projection head, batched over lanes: Linear -> ReLU -> Linear -----
    feat = feat_ref[...]                                    # (C_OUT, B)
    h = jnp.dot(w1t, feat, preferred_element_type=jnp.float32) + b1
    h = jnp.maximum(h, 0.0)                                 # (HID, B)
    z = jnp.dot(w2t, h, preferred_element_type=jnp.float32) + b2
    out_ref[...] = z.astype(out_ref.dtype)                  # (PROJ, B), 1 store


def _pack_params(params):
    """Pack all weights/biases into one f32 slab -> a single parameter DMA."""
    wconv, bconv, w1, b1, w2, b2 = params
    wconv_t = jnp.transpose(wconv.reshape(KKC, C_OUT))      # (C_OUT, KKC)
    slab = jnp.zeros((P_ROWS, P_COLS), jnp.float32)
    slab = slab.at[R_WCONV:R_WCONV + C_OUT, 0:KKC].set(wconv_t)
    slab = slab.at[R_W1T:R_W1T + HID, 0:C_OUT].set(jnp.transpose(w1))
    slab = slab.at[R_W2T:R_W2T + PROJ, 0:HID].set(jnp.transpose(w2))
    slab = slab.at[R_BCONV:R_BCONV + C_OUT, 0:1].set(bconv.reshape(C_OUT, 1))
    slab = slab.at[R_B1:R_B1 + HID, 0:1].set(b1.reshape(HID, 1))
    slab = slab.at[R_B2:R_B2 + PROJ, 0:1].set(b2.reshape(PROJ, 1))
    return slab


@jax.jit
def simclr_forward(x_nchw, params):
    """One-time layout prep (XLA glue) + a single no-grid pallas_call."""
    # NCHW -> NHWC, 'same' halo pad, im2col taps (HW on the lane axis).
    # TODO(synk): at realistic H/W/B move im2col inside the kernel (DMA the
    # padded NHWC tile once, form the 9 taps from VMEM) to avoid the 9x HBM
    # duplication -- it becomes the binding term first on v5e's lower HBM BW.
    x = jnp.transpose(x_nchw, (0, 2, 3, 1))
    xp = jnp.pad(x, ((0, 0), (1, 1), (1, 1), (0, 0)))
    taps = jnp.stack([xp[:, kh:kh + H, kw:kw + W, :]
                      for kh in range(K) for kw in range(K)], axis=0)
    # (K*K, B, H, W, C_IN) -> (K*K, C_IN, B, H, W) -> (KKC, B*HW)
    patches = jnp.transpose(taps, (0, 4, 1, 2, 3)).reshape(KKC, B * HW)
    patches = patches.astype(jnp.float32)

    slab = _pack_params(params)

    flops = 2 * (C_OUT * KKC * B * HW      # conv as im2col matmul
                 + HID * C_OUT * B         # projection layer 1
                 + PROJ * HID * B)         # projection layer 2
    bytes_accessed = 4 * (patches.size + slab.size + PROJ * B)

    z = pl.pallas_call(
        _simclr_kernel,
        out_shape=jax.ShapeDtypeStruct((PROJ, B), jnp.float32),
        in_specs=[pl.BlockSpec(memory_space=pltpu.MemorySpace.VMEM),
                  pl.BlockSpec(memory_space=pltpu.MemorySpace.VMEM)],
        out_specs=pl.BlockSpec(memory_space=pltpu.MemorySpace.VMEM),
        scratch_shapes=[pltpu.VMEM((C_OUT, B), jnp.float32)],
        cost_estimate=pl.CostEstimate(flops=flops, transcendentals=0,
                                      bytes_accessed=bytes_accessed),
    )(patches, slab)
    return jnp.transpose(z)                                  # (B, PROJ)


def _init_params(key):
    ks = jax.random.split(key, 6)
    wconv = 0.1 * jax.random.normal(ks[0], (K, K, C_IN, C_OUT), jnp.float32)
    bconv = 0.1 * jax.random.normal(ks[1], (1, C_OUT), jnp.float32)
    w1 = 0.1 * jax.random.normal(ks[2], (C_OUT, HID), jnp.float32)
    b1 = 0.1 * jax.random.normal(ks[3], (1, HID), jnp.float32)
    w2 = 0.1 * jax.random.normal(ks[4], (HID, PROJ), jnp.float32)
    b2 = 0.1 * jax.random.normal(ks[5], (1, PROJ), jnp.float32)
    return (wconv, bconv, w1, b1, w2, b2)


def _reference(x_nchw, params):
    """Plain-JAX f32 reference matching the PyTorch semantics."""
    wconv, bconv, w1, b1, w2, b2 = params
    x = jnp.transpose(x_nchw, (0, 2, 3, 1))
    y = jax.lax.conv_general_dilated(
        x, wconv, window_strides=(1, 1), padding="SAME",
        dimension_numbers=("NHWC", "HWIO", "NHWC"))
    y = jnp.maximum(y + bconv.reshape(1, 1, 1, C_OUT), 0.0)
    feat = y.mean(axis=(1, 2))
    h = jnp.maximum(feat @ w1 + b1, 0.0)
    return h @ w2 + b2


if __name__ == "__main__":
    key = jax.random.PRNGKey(0)
    k_x, k_p = jax.random.split(key)
    x = jax.random.normal(k_x, (B, C_IN, H, W), jnp.float32)   # PyTorch NCHW
    params = _init_params(k_p)

    out = jax.block_until_ready(simclr_forward(x, params))
    ref = _reference(x, params)

    assert out.shape == (B, PROJ)
    # All operands are f32 (f32 MXU accumulation); tolerance kept generous to
    # cover XLA's default-precision reference conv/dots on TPU.
    assert jnp.allclose(out, ref, atol=1e-2, rtol=1e-2), "mismatch vs reference"
    print("KERNEL_OK")
</pallas_src>

<mosaic_0001>
module attributes {stable_mosaic.version = 11 : i64} {
  func.func @_simclr_kernel(%arg0: memref<36x512xf32, #tpu.memory_space<vmem>>, %arg1: memref<112x36xf32, #tpu.memory_space<vmem>>, %arg2: memref<16x2xf32, #tpu.memory_space<vmem>>, %arg3: memref<8x2xf32, #tpu.memory_space<vmem>>) attributes {dimension_semantics = [], scalar_prefetch = 0 : i64, scratch_operands = 1 : i64, tpu.core_type = #tpu.core_type<tc>} {
    %c0 = arith.constant 0 : index
    %c0_0 = arith.constant 0 : index
    %0 = vector.load %arg1[%c0, %c0_0] : memref<112x36xf32, #tpu.memory_space<vmem>>, vector<8x36xf32>
    %c8 = arith.constant 8 : index
    %c0_1 = arith.constant 0 : index
    %1 = vector.load %arg1[%c8, %c0_1] : memref<112x36xf32, #tpu.memory_space<vmem>>, vector<32x8xf32>
    %c40 = arith.constant 40 : index
    %c0_2 = arith.constant 0 : index
    %2 = vector.load %arg1[%c40, %c0_2] : memref<112x36xf32, #tpu.memory_space<vmem>>, vector<16x32xf32>
    %c56 = arith.constant 56 : index
    %c0_3 = arith.constant 0 : index
    %3 = vector.load %arg1[%c56, %c0_3] : memref<112x36xf32, #tpu.memory_space<vmem>>, vector<8x1xf32>
    %c64 = arith.constant 64 : index
    %c0_4 = arith.constant 0 : index
    %4 = vector.load %arg1[%c64, %c0_4] : memref<112x36xf32, #tpu.memory_space<vmem>>, vector<32x1xf32>
    %c96 = arith.constant 96 : index
    %c0_5 = arith.constant 0 : index
    %5 = vector.load %arg1[%c96, %c0_5] : memref<112x36xf32, #tpu.memory_space<vmem>>, vector<16x1xf32>
    %c0_6 = arith.constant 0 : index
    %c0_7 = arith.constant 0 : index
    %6 = vector.load %arg0[%c0_6, %c0_7] : memref<36x512xf32, #tpu.memory_space<vmem>>, vector<36x512xf32>
    %cst = arith.constant dense<0.000000e+00> : vector<8x512xf32>
    %7 = tpu.matmul %0, %6, %cst {dimension_numbers = #tpu.dot_dimension_numbers<[1], [0], [0], [1], [0, 0, 1, 1], [], []>} : vector<8x36xf32>, vector<36x512xf32>, vector<8x512xf32> -> vector<8x512xf32>
    %8 = vector.broadcast %3 : vector<8x1xf32> to vector<8x512xf32>
    %9 = arith.addf %7, %8 : vector<8x512xf32>
    %cst_8 = arith.constant 0.000000e+00 : f32
    %10 = vector.broadcast %cst_8 : f32 to vector<8x512xf32>
    %11 = arith.maximumf %9, %10 : vector<8x512xf32>
    %12 = vector.extract_strided_slice %11 {offsets = [0, 0], sizes = [8, 256], strides = [1, 1]} : vector<8x512xf32> to vector<8x256xf32>
    %cst_9 = arith.constant dense<0.000000e+00> : vector<8xf32>
    %13 = vector.multi_reduction <add>, %12, %cst_9 [1] : vector<8x256xf32> to vector<8xf32>
    %14 = vector.shape_cast %13 : vector<8xf32> to vector<8x1xf32>
    %cst_10 = arith.constant 3.906250e-03 : f32
    %15 = vector.broadcast %cst_10 : f32 to vector<8x1xf32>
    %16 = arith.mulf %14, %15 : vector<8x1xf32>
    %c0_11 = arith.constant 0 : index
    %c0_12 = arith.constant 0 : index
    %17 = vector.load %arg3[%c0_11, %c0_12] : memref<8x2xf32, #tpu.memory_space<vmem>>, vector<8x1xf32>
    tpu.vector_store %arg3[%c0_11, %c0_12], %16 {strides = array<i32>} : memref<8x2xf32, #tpu.memory_space<vmem>>, vector<8x1xf32>,
    %18 = vector.extract_strided_slice %11 {offsets = [0, 256], sizes = [8, 256], strides = [1, 1]} : vector<8x512xf32> to vector<8x256xf32>
    %cst_13 = arith.constant dense<0.000000e+00> : vector<8xf32>
    %19 = vector.multi_reduction <add>, %18, %cst_13 [1] : vector<8x256xf32> to vector<8xf32>
    %20 = vector.shape_cast %19 : vector<8xf32> to vector<8x1xf32>
    %cst_14 = arith.constant 3.906250e-03 : f32
    %21 = vector.broadcast %cst_14 : f32 to vector<8x1xf32>
    %22 = arith.mulf %20, %21 : vector<8x1xf32>
    %c0_15 = arith.constant 0 : index
    %c1 = arith.constant 1 : index
    %23 = vector.load %arg3[%c0_15, %c1] : memref<8x2xf32, #tpu.memory_space<vmem>>, vector<8x1xf32>
    tpu.vector_store %arg3[%c0_15, %c1], %22 {strides = array<i32>} : memref<8x2xf32, #tpu.memory_space<vmem>>, vector<8x1xf32>,
    %c0_16 = arith.constant 0 : index
    %c0_17 = arith.constant 0 : index
    %24 = vector.load %arg3[%c0_16, %c0_17] : memref<8x2xf32, #tpu.memory_space<vmem>>, vector<8x2xf32>
    %cst_18 = arith.constant dense<0.000000e+00> : vector<32x2xf32>
    %25 = tpu.matmul %1, %24, %cst_18 {dimension_numbers = #tpu.dot_dimension_numbers<[1], [0], [0], [1], [0, 0, 1, 1], [], []>} : vector<32x8xf32>, vector<8x2xf32>, vector<32x2xf32> -> vector<32x2xf32>
    %26 = vector.broadcast %4 : vector<32x1xf32> to vector<32x2xf32>
    %27 = arith.addf %25, %26 : vector<32x2xf32>
    %cst_19 = arith.constant 0.000000e+00 : f32
    %28 = vector.broadcast %cst_19 : f32 to vector<32x2xf32>
    %29 = arith.maximumf %27, %28 : vector<32x2xf32>
    %cst_20 = arith.constant dense<0.000000e+00> : vector<16x2xf32>
    %30 = tpu.matmul %2, %29, %cst_20 {dimension_numbers = #tpu.dot_dimension_numbers<[1], [0], [0], [1], [0, 0, 1, 1], [], []>} : vector<16x32xf32>, vector<32x2xf32>, vector<16x2xf32> -> vector<16x2xf32>
    %31 = vector.broadcast %5 : vector<16x1xf32> to vector<16x2xf32>
    %32 = arith.addf %30, %31 : vector<16x2xf32>
    %c0_21 = arith.constant 0 : index
    %c0_22 = arith.constant 0 : index
    %33 = vector.load %arg2[%c0_21, %c0_22] : memref<16x2xf32, #tpu.memory_space<vmem>>, vector<16x2xf32>
    tpu.vector_store %arg2[%c0_21, %c0_22], %32 {strides = array<i32>} : memref<16x2xf32, #tpu.memory_space<vmem>>, vector<16x2xf32>,
    return
  }
}

</mosaic_0001>

<llo_original>
// kernel: simclr_forward.1
$region0: #{simclr_forward.1}
  #allocation0 [shape = 'u32[]', space=smem, size = 0x4, offset = 0x4, fixed_abs, tag = 'smem constant byte address 0x4 - core index']
  #allocation1 [shape = 'u32[144,128]{1,0:T(1,128)}', space=vmem, size = 0x12000, scoped, tag = 'internal scratch']
  #allocation2 [shape = 'f32[8,2]{1,0:T(8,128)}', space=vmem, size = 0x1000, scoped, tag = 'scratch operand']
  %s0 = inlined_call_operand.vmem [shape: f32[36,512], index: 0, kind: input, shape index: {}]
  %s1 = inlined_call_operand.vmem [shape: f32[112,36], index: 1, kind: input, shape index: {}]
  %s2 = inlined_call_operand.vmem [shape: f32[16,2], index: 2, kind: output, shape index: {}]
  %s3 = sld [smem:[#allocation0]]
  $region18: #{simclr_forward.1} parent=0
    _
  %s5 = ssub.s32 1, %s3
  %s6 = scalar_select 0, %s5, %s3
  // Predicated region
  $region2: #{simclr_forward.1} parent=0 // pred_check
    _
  $region3: #{simclr_forward.1} parent=0 // pred_check_branch
    %8 = sbr.rel (0) target = $region5
  $region4: #{simclr_forward.1} parent=0 // pred_region
    _
  $region5: #{simclr_forward.1} parent=0 // pred_fallthru
    _
  // Predicated region
  $region6: #{simclr_forward.1} parent=0 // pred_check
    _
  $region7: #{simclr_forward.1} parent=0 // pred_check_branch
    %10 = sbr.rel (0) target = $region9
  $region8: #{simclr_forward.1} parent=0 // pred_region
    _
  $region9: #{simclr_forward.1} parent=0 // pred_fallthru
    _
  %v11 = vld [vmem:[%s1] sm:$0xff]
  %v12 = vld [vmem:[%s1 + $0x8] sm:$0xff]
  %v13 = vld [vmem:[%s1 + $0x10] sm:$0xff]
  %v14 = vld [vmem:[%s1 + $0x18] sm:$0xff]
  %v15 = vld [vmem:[%s1 + $0x20] sm:$0xff]
  %v16 = vld [vmem:[%s1 + $0x28] sm:$0xff]
  %v17 = vld [vmem:[%s1 + $0x30] sm:$0xff]
  %v18 = vld [vmem:[%s1 + $0x38] sm:$0xff]
  %v19 = vld [vmem:[%s1 + $0x40] sm:$0xff]
  %v20 = vld [vmem:[%s1 + $0x48] sm:$0xff]
  %v21 = vld [vmem:[%s1 + $0x50] sm:$0xff]
  %v22 = vld [vmem:[%s1 + $0x58] sm:$0xff]
  %v23 = vld [vmem:[%s1 + $0x60] sm:$0xff]
  %v24 = vld [vmem:[%s1 + $0x68] sm:$0xff]
  %v25 = vld [vmem:[%s0] sm:$0xff]
  %v26 = vld [vmem:[%s0 + $0x8] sm:$0xff]
  %v27 = vld [vmem:[%s0 + $0x10] sm:$0xff]
  %v28 = vld [vmem:[%s0 + $0x18] sm:$0xff]
  %v29 = vld [vmem:[%s0 + $0x20] sm:$0xff]
  %v30 = vld [vmem:[%s0 + $0x28] sm:$0xff]
  %v31 = vld [vmem:[%s0 + $0x30] sm:$0xff]
  %v32 = vld [vmem:[%s0 + $0x38] sm:$0xff]
  %v33 = vld [vmem:[%s0 + $0x40] sm:$0xff]
  %v34 = vld [vmem:[%s0 + $0x48] sm:$0xff]
  %v35 = vld [vmem:[%s0 + $0x50] sm:$0xff]
  %v36 = vld [vmem:[%s0 + $0x58] sm:$0xff]
  %v37 = vld [vmem:[%s0 + $0x60] sm:$0xff]
  %v38 = vld [vmem:[%s0 + $0x68] sm:$0xff]
  %v39 = vld [vmem:[%s0 + $0x70] sm:$0xff]
  %v40 = vld [vmem:[%s0 + $0x78] sm:$0xff]
  %v41 = vld [vmem:[%s0 + $0x80] sm:$0xf]
  %v42 = vld [vmem:[%s0 + $0x88] sm:$0xf]
  %v43 = vld [vmem:[%s0 + $0x90] sm:$0xf]
  %v44 = vld [vmem:[%s0 + $0x98] sm:$0xf]
  %46 = vset.pattern.permute.xlu0 0
  %47 = vperm.xlu0 %46, %v18
  %v48 = vpop.permute.xlu0 %47
  %vm50 = vcmask 293888
  %v52 = vsel %vm50, %v11, 0
  %vm54 = vcmask 1043456
  %v56 = vsel %vm54, %v41, 0
  %v59 = vsel %vm54, %v42, 0
  %v62 = vsel %vm54, %v43, 0
  %v65 = vsel %vm54, %v44, 0
  %67 = vmatprep.subr.mxu0 0.0
  %68 = vmatpush1.msra.mxu0 0.0
  %69 = vmatprep.subr.mxu0 0.0
  %70 = vmatpush1.msra.mxu0 0.0
  %71 = vmatprep.subr.mxu0 0.0
  %72 = vmatpush1.msra.mxu0 0.0
  %73 = vmatprep.subr.mxu0 0.0
  %74 = vmatpush1.msra.mxu0 0.0
  %75 = vmatprep.subr.mxu0 0.0
  %76 = vmatpush1.msra.mxu0 0.0
  %77 = vmatprep.subr.mxu0 0.0
  %78 = vmatpush1.msra.mxu0 0.0
  %79 = vmatprep.subr.mxu0 0.0
  %80 = vmatpush1.msra.mxu0 0.0
  %81 = vmatprep.subr.mxu0 0.0
  %82 = vmatpush1.msra.mxu0 0.0
  %83 = vmatprep.subr.mxu0 0.0
  %84 = vmatpush1.msra.mxu0 0.0
  %85 = vmatprep.subr.mxu0 0.0
  %86 = vmatpush1.msra.mxu0 0.0
  %87 = vmatprep.subr.mxu0 0.0
  %88 = vmatpush1.msra.mxu0 0.0
  %89 = vmatprep.subr.mxu0 %v59
  %90 = vmatpush1.msra.mxu0 %v56
  %91 = vmatprep.subr.mxu0 %v38
  %92 = vmatpush1.msra.mxu0 %v37
  %93 = vmatprep.subr.mxu0 %v34
  %94 = vmatpush1.msra.mxu0 %v33
  %95 = vmatprep.subr.mxu0 %v30
  %96 = vmatpush1.msra.mxu0 %v29
  %97 = vmatprep.subr.mxu0 %v26
  %98 = vmatpush1.msra.mxu0 %v25
  %99 = vmatprep.subr.mxu0 0.0
  %100 = vmatpush2.msra.mxu0 0.0
  %101 = vmatprep.subr.mxu0 0.0
  %102 = vmatpush2.msra.mxu0 0.0
  %103 = vmatprep.subr.mxu0 0.0
  %104 = vmatpush2.msra.mxu0 0.0
  %105 = vmatprep.subr.mxu0 0.0
  %106 = vmatpush2.msra.mxu0 0.0
  %107 = vmatprep.subr.mxu0 0.0
  %108 = vmatpush2.msra.mxu0 0.0
  %109 = vmatprep.subr.mxu0 0.0
  %110 = vmatpush2.msra.mxu0 0.0
  %111 = vmatprep.subr.mxu0 0.0
  %112 = vmatpush2.msra.mxu0 0.0
  %113 = vmatprep.subr.mxu0 0.0
  %114 = vmatpush2.msra.mxu0 0.0
  %115 = vmatprep.subr.mxu0 0.0
  %116 = vmatpush2.msra.mxu0 0.0
  %117 = vmatprep.subr.mxu0 0.0
  %118 = vmatpush2.msra.mxu0 0.0
  %119 = vmatprep.subr.mxu0 0.0
  %120 = vmatpush2.msra.mxu0 0.0
  %121 = vmatprep.subr.mxu0 0.0
  %122 = vmatpush2.msra.mxu0 0.0
  %123 = vmatprep.subr.mxu0 0.0
  %124 = vmatpush2.msra.mxu0 0.0
  %125 = vmatprep.subr.mxu0 0.0
  %126 = vmatpush2.msra.mxu0 0.0
  %127 = vmatprep.subr.mxu0 0.0
  %128 = vmatpush2.msra.mxu0 0.0
  %129 = vmatprep.subr.mxu0 0.0
  %130 = vmatpush2.msra.mxu0 0.0
  %131 = vmatprep.mubr.f32.mxu0 0.0
  %132 = vmatmul.mubr.f32.gmra.mxu0 %v52
  %v133 = vpop.f32.mrf.mxu0
  %v134 = vadd.f32 %v48, %v133
  %v135 = vpop.f32.mrf.mxu0
  %v136 = vadd.f32 %v48, %v135
  %137 = vdwg.mxu0
  %138 = vmatprep.subr.mxu0 0.0
  %139 = vmatpush1.msra.mxu0 0.0
  %140 = vmatprep.subr.mxu0 0.0
  %141 = vmatpush1.msra.mxu0 0.0
  %142 = vmatprep.subr.mxu0 0.0
  %143 = vmatpush1.msra.mxu0 0.0
  %144 = vmatprep.subr.mxu0 0.0
  %145 = vmatpush1.msra.mxu0 0.0
  %146 = vmatprep.subr.mxu0 0.0
  %147 = vmatpush1.msra.mxu0 0.0
  %148 = vmatprep.subr.mxu0 0.0
  %149 = vmatpush1.msra.mxu0 0.0
  %150 = vmatprep.subr.mxu0 0.0
  %151 = vmatpush1.msra.mxu0 0.0
  %152 = vmatprep.subr.mxu0 0.0
  %153 = vmatpush1.msra.mxu0 0.0
  %154 = vmatprep.subr.mxu0 0.0
  %155 = vmatpush1.msra.mxu0 0.0
  %156 = vmatprep.subr.mxu0 0.0
  %157 = vmatpush1.msra.mxu0 0.0
  %158 = vmatprep.subr.mxu0 0.0
  %159 = vmatpush1.msra.mxu0 0.0
  %160 = vmatprep.subr.mxu0 %v65
  %161 = vmatpush1.msra.mxu0 %v62
  %162 = vmatprep.subr.mxu0 %v40
  %163 = vmatpush1.msra.mxu0 %v39
  %164 = vmatprep.subr.mxu0 %v36
  %165 = vmatpush1.msra.mxu0 %v35
  %166 = vmatprep.subr.mxu0 %v32
  %167 = vmatpush1.msra.mxu0 %v31
  %168 = vmatprep.subr.mxu0 %v28
  %169 = vmatpush1.msra.mxu0 %v27
  %170 = vmatprep.subr.mxu0 0.0
  %171 = vmatpush2.msra.mxu0 0.0
  %172 = vmatprep.subr.mxu0 0.0
  %173 = vmatpush2.msra.mxu0 0.0
  %174 = vmatprep.subr.mxu0 0.0
  %175 = vmatpush2.msra.mxu0 0.0
  %176 = vmatprep.subr.mxu0 0.0
  %177 = vmatpush2.msra.mxu0 0.0
  %178 = vmatprep.subr.mxu0 0.0
  %179 = vmatpush2.msra.mxu0 0.0
  %180 = vmatprep.subr.mxu0 0.0
  %181 = vmatpush2.msra.mxu0 0.0
  %182 = vmatprep.subr.mxu0 0.0
  %183 = vmatpush2.msra.mxu0 0.0
  %184 = vmatprep.subr.mxu0 0.0
  %185 = vmatpush2.msra.mxu0 0.0
  %186 = vmatprep.subr.mxu0 0.0
  %187 = vmatpush2.msra.mxu0 0.0
  %188 = vmatprep.subr.mxu0 0.0
  %189 = vmatpush2.msra.mxu0 0.0
  %190 = vmatprep.subr.mxu0 0.0
  %191 = vmatpush2.msra.mxu0 0.0
  %192 = vmatprep.subr.mxu0 0.0
  %193 = vmatpush2.msra.mxu0 0.0
  %194 = vmatprep.subr.mxu0 0.0
  %195 = vmatpush2.msra.mxu0 0.0
  %196 = vmatprep.subr.mxu0 0.0
  %197 = vmatpush2.msra.mxu0 0.0
  %198 = vmatprep.subr.mxu0 0.0
  %199 = vmatpush2.msra.mxu0 0.0
  %200 = vmatprep.subr.mxu0 0.0
  %201 = vmatpush2.msra.mxu0 0.0
  %202 = vmatprep.mubr.f32.mxu0 0.0
  %203 = vmatmul.mubr.f32.gmra.mxu0 %v52
  %v204 = vpop.f32.mrf.mxu0
  %v205 = vadd.f32 %v48, %v204
  %v206 = vpop.f32.mrf.mxu0
  %v207 = vadd.f32 %v48, %v206
  %208 = vdwg.mxu0
  %v209 = vmax.f32 %v134, 0.0
  %v210 = vmax.f32 %v136, 0.0
  %v211 = vmax.f32 %v205, 0.0
  %v212 = vmax.f32 %v207, 0.0
  %v213 = vadd.f32 %v209, %v210
  %214 = vadd.xlane.f32.xlu0 %v213
  %v215 = vpop.xlane.xlu0 %214
  %v216 = vmul.f32 %v215, 0.00390625
  %vm217 = vcmask 7168
  %218 = vst.msk [vmem:[#allocation2] sm:$0xff] %vm217, %v216
  %v219 = vadd.f32 %v211, %v212
  %220 = vadd.xlane.f32.xlu0 %v219
  %v221 = vpop.xlane.xlu0 %220
  %v222 = vmul.f32 %v221, 0.00390625
  %vm223 = vcmask 15368
  %224 = vst.msk [vmem:[#allocation2] sm:$0xff] %vm223, %v222
  %v225 = vld [vmem:[#allocation2] sm:$0xff]
  %227 = vset.pattern.permute.xlu0 0
  %228 = vperm.xlu0 %227, %v19
  %v229 = vpop.permute.xlu0 %228
  %232 = vset.pattern.permute.xlu0 0
  %233 = vperm.xlu0 %232, %v20
  %v234 = vpop.permute.xlu0 %233
  %237 = vset.pattern.permute.xlu0 0
  %238 = vperm.xlu0 %237, %v21
  %v239 = vpop.permute.xlu0 %238
  %242 = vset.pattern.permute.xlu0 0
  %243 = vperm.xlu0 %242, %v22
  %v244 = vpop.permute.xlu0 %243
  %vm246 = vcmask 64512
  %v248 = vsel %vm246, %v12, 0
  %v251 = vsel %vm246, %v13, 0
  %v254 = vsel %vm246, %v14, 0
  %v257 = vsel %vm246, %v15, 0
  %259 = vmatprep.subr.mxu0 0.0
  %260 = vmatpush1.msra.mxu0 0.0
  %261 = vmatprep.subr.mxu0 0.0
  %262 = vmatpush1.msra.mxu0 0.0
  %263 = vmatprep.subr.mxu0 0.0
  %264 = vmatpush1.msra.mxu0 0.0
  %265 = vmatprep.subr.mxu0 0.0
  %266 = vmatpush1.msra.mxu0 0.0
  %267 = vmatprep.subr.mxu0 0.0
  %268 = vmatpush1.msra.mxu0 0.0
  %269 = vmatprep.subr.mxu0 0.0
  %270 = vmatpush1.msra.mxu0 0.0
  %271 = vmatprep.subr.mxu0 0.0
  %272 = vmatpush1.msra.mxu0 0.0
  %273 = vmatprep.subr.mxu0 0.0
  %274 = vmatpush1.msra.mxu0 0.0
  %275 = vmatprep.subr.mxu0 0.0
  %276 = vmatpush1.msra.mxu0 0.0
  %277 = vmatprep.subr.mxu0 0.0
  %278 = vmatpush1.msra.mxu0 0.0
  %279 = vmatprep.subr.mxu0 0.0
  %280 = vmatpush1.msra.mxu0 0.0
  %281 = vmatprep.subr.mxu0 0.0
  %282 = vmatpush1.msra.mxu0 0.0
  %283 = vmatprep.subr.mxu0 0.0
  %284 = vmatpush1.msra.mxu0 0.0
  %285 = vmatprep.subr.mxu0 0.0
  %286 = vmatpush1.msra.mxu0 0.0
  %287 = vmatprep.subr.mxu0 0.0
  %288 = vmatpush1.msra.mxu0 0.0
  %289 = vmatprep.subr.mxu0 0.0
  %290 = vmatpush1.msra.mxu0 %v225
  %291 = vmatprep.subr.mxu0 0.0
  %292 = vmatpush2.msra.mxu0 0.0
  %293 = vmatprep.subr.mxu0 0.0
  %294 = vmatpush2.msra.mxu0 0.0
  %295 = vmatprep.subr.mxu0 0.0
  %296 = vmatpush2.msra.mxu0 0.0
  %297 = vmatprep.subr.mxu0 0.0
  %298 = vmatpush2.msra.mxu0 0.0
  %299 = vmatprep.subr.mxu0 0.0
  %300 = vmatpush2.msra.mxu0 0.0
  %301 = vmatprep.subr.mxu0 0.0
  %302 = vmatpush2.msra.mxu0 0.0
  %303 = vmatprep.subr.mxu0 0.0
  %304 = vmatpush2.msra.mxu0 0.0
  %305 = vmatprep.subr.mxu0 0.0
  %306 = vmatpush2.msra.mxu0 0.0
  %307 = vmatprep.subr.mxu0 0.0
  %308 = vmatpush2.msra.mxu0 0.0
  %309 = vmatprep.subr.mxu0 0.0
  %310 = vmatpush2.msra.mxu0 0.0
  %311 = vmatprep.subr.mxu0 0.0
  %312 = vmatpush2.msra.mxu0 0.0
  %313 = vmatprep.subr.mxu0 0.0
  %314 = vmatpush2.msra.mxu0 0.0
  %315 = vmatprep.subr.mxu0 0.0
  %316 = vmatpush2.msra.mxu0 0.0
  %317 = vmatprep.subr.mxu0 0.0
  %318 = vmatpush2.msra.mxu0 0.0
  %319 = vmatprep.subr.mxu0 0.0
  %320 = vmatpush2.msra.mxu0 0.0
  %321 = vmatprep.subr.mxu0 0.0
  %322 = vmatpush2.msra.mxu0 0.0
  %323 = vmatprep.mubr.f32.mxu0 0.0
  %324 = vmatmul.mubr.f32.gmra.mxu0 %v248
  %v325 = vpop.f32.mrf.mxu0
  %v326 = vadd.f32 %v229, %v325
  %v327 = vpop.f32.mrf.mxu0
  %328 = vmatprep.mubr.f32.mxu0 0.0
  %329 = vmatmul.mubr.f32.gmra.mxu0 %v251
  %v330 = vpop.f32.mrf.mxu0
  %v331 = vadd.f32 %v234, %v330
  %v332 = vpop.f32.mrf.mxu0
  %333 = vmatprep.mubr.f32.mxu0 0.0
  %334 = vmatmul.mubr.f32.gmra.mxu0 %v254
  %v335 = vpop.f32.mrf.mxu0
  %v336 = vadd.f32 %v239, %v335
  %v337 = vpop.f32.mrf.mxu0
  %338 = vmatprep.mubr.f32.mxu0 0.0
  %339 = vmatmul.mubr.f32.gmra.mxu0 %v257
  %v340 = vpop.f32.mrf.mxu0
  %v341 = vadd.f32 %v244, %v340
  %v342 = vpop.f32.mrf.mxu0
  %343 = vdwg.mxu0
  %v344 = vmax.f32 %v326, 0.0
  %v345 = vmax.f32 %v331, 0.0
  %v346 = vmax.f32 %v336, 0.0
  %v347 = vmax.f32 %v341, 0.0
  %349 = vset.pattern.permute.xlu0 0
  %350 = vperm.xlu0 %349, %v23
  %v351 = vpop.permute.xlu0 %350
  %354 = vset.pattern.permute.xlu0 0
  %355 = vperm.xlu0 %354, %v24
  %v356 = vpop.permute.xlu0 %355
  %vm358 = vcmask 261120
  %v360 = vsel %vm358, %v16, 0
  %v363 = vsel %vm358, %v17, 0
  %365 = vmatprep.subr.mxu0 0.0
  %366 = vmatpush1.msra.mxu0 0.0
  %367 = vmatprep.subr.mxu0 0.0
  %368 = vmatpush1.msra.mxu0 0.0
  %369 = vmatprep.subr.mxu0 0.0
  %370 = vmatpush1.msra.mxu0 0.0
  %371 = vmatprep.subr.mxu0 0.0
  %372 = vmatpush1.msra.mxu0 0.0
  %373 = vmatprep.subr.mxu0 0.0
  %374 = vmatpush1.msra.mxu0 0.0
  %375 = vmatprep.subr.mxu0 0.0
  %376 = vmatpush1.msra.mxu0 0.0
  %377 = vmatprep.subr.mxu0 0.0
  %378 = vmatpush1.msra.mxu0 0.0
  %379 = vmatprep.subr.mxu0 0.0
  %380 = vmatpush1.msra.mxu0 0.0
  %381 = vmatprep.subr.mxu0 0.0
  %382 = vmatpush1.msra.mxu0 0.0
  %383 = vmatprep.subr.mxu0 0.0
  %384 = vmatpush1.msra.mxu0 0.0
  %385 = vmatprep.subr.mxu0 0.0
  %386 = vmatpush1.msra.mxu0 0.0
  %387 = vmatprep.subr.mxu0 0.0
  %388 = vmatpush1.msra.mxu0 0.0
  %389 = vmatprep.subr.mxu0 0.0
  %390 = vmatpush1.msra.mxu0 %v347
  %391 = vmatprep.subr.mxu0 0.0
  %392 = vmatpush1.msra.mxu0 %v346
  %393 = vmatprep.subr.mxu0 0.0
  %394 = vmatpush1.msra.mxu0 %v345
  %395 = vmatprep.subr.mxu0 0.0
  %396 = vmatpush1.msra.mxu0 %v344
  %397 = vmatprep.subr.mxu0 0.0
  %398 = vmatpush2.msra.mxu0 0.0
  %399 = vmatprep.subr.mxu0 0.0
  %400 = vmatpush2.msra.mxu0 0.0
  %401 = vmatprep.subr.mxu0 0.0
  %402 = vmatpush2.msra.mxu0 0.0
  %403 = vmatprep.subr.mxu0 0.0
  %404 = vmatpush2.msra.mxu0 0.0
  %405 = vmatprep.subr.mxu0 0.0
  %406 = vmatpush2.msra.mxu0 0.0
  %407 = vmatprep.subr.mxu0 0.0
  %408 = vmatpush2.msra.mxu0 0.0
  %409 = vmatprep.subr.mxu0 0.0
  %410 = vmatpush2.msra.mxu0 0.0
  %411 = vmatprep.subr.mxu0 0.0
  %412 = vmatpush2.msra.mxu0 0.0
  %413 = vmatprep.subr.mxu0 0.0
  %414 = vmatpush2.msra.mxu0 0.0
  %415 = vmatprep.subr.mxu0 0.0
  %416 = vmatpush2.msra.mxu0 0.0
  %417 = vmatprep.subr.mxu0 0.0
  %418 = vmatpush2.msra.mxu0 0.0
  %419 = vmatprep.subr.mxu0 0.0
  %420 = vmatpush2.msra.mxu0 0.0
  %421 = vmatprep.subr.mxu0 0.0
  %422 = vmatpush2.msra.mxu0 0.0
  %423 = vmatprep.subr.mxu0 0.0
  %424 = vmatpush2.msra.mxu0 0.0
  %425 = vmatprep.subr.mxu0 0.0
  %426 = vmatpush2.msra.mxu0 0.0
  %427 = vmatprep.subr.mxu0 0.0
  %428 = vmatpush2.msra.mxu0 0.0
  %429 = vmatprep.mubr.f32.mxu0 0.0
  %430 = vmatmul.mubr.f32.gmra.mxu0 %v360
  %v431 = vpop.f32.mrf.mxu0
  %v432 = vadd.f32 %v351, %v431
  %v433 = vpop.f32.mrf.mxu0
  %434 = vmatprep.mubr.f32.mxu0 0.0
  %435 = vmatmul.mubr.f32.gmra.mxu0 %v363
  %v436 = vpop.f32.mrf.mxu0
  %v437 = vadd.f32 %v356, %v436
  %v438 = vpop.f32.mrf.mxu0
  %439 = vdwg.mxu0
  %vm440 = vcmask 15360
  %441 = vst.msk [vmem:[%s2] sm:$0xff] %vm440, %v432
  %442 = vst.msk [vmem:[%s2 + $0x8] sm:$0xff] %vm440, %v437
  // Predicated region
  $region10: #{simclr_forward.1} parent=0 // pred_check
    _
  $region11: #{simclr_forward.1} parent=0 // pred_check_branch
    %444 = sbr.rel (0) target = $region13
  $region12: #{simclr_forward.1} parent=0 // pred_region
    _
  $region13: #{simclr_forward.1} parent=0 // pred_fallthru
    _
  // Predicated region
  $region14: #{simclr_forward.1} parent=0 // pred_check
    _
  $region15: #{simclr_forward.1} parent=0 // pred_check_branch
    %446 = sbr.rel (0) target = $region17
  $region16: #{simclr_forward.1} parent=0 // pred_region
    _
  $region17: #{simclr_forward.1} parent=0 // pred_fallthru
    _

</llo_original>
